<compile_context>
chip_gen: v7x
topology: tpu7x:2x2x1
jax: 0.10.0
libtpu: 0.0.40
codegen_flags: <defaults>
</compile_context>

<pallas_src>
import jax
import jax.numpy as jnp
from jax.experimental import pallas as pl
from jax.experimental.pallas import tpu as pltpu

_LANE = 128                          # vreg lane width: last block dim
_TARGET_BLOCK_BYTES = 4 * 1024 * 1024   # ~4 MiB per block per array
_MIN_SPLIT_BYTES = 2 * 1024 * 1024      # force >=2 grid steps above this size
_VMEM_LIMIT_BYTES = 32 * 1024 * 1024    # safe on v5e/v6e/v7x; fits 2x2x4MiB buffers


def _round_up(a: int, b: int) -> int:
    return -(-a // b) * b


def _h_swish_kernel(x_ref, o_ref):
    x = x_ref[...]
    # h_swish: x * relu6(x + 3) / 6 == x * (clip(x + 3, 0, 6) / 6); pure VPU.
    o_ref[...] = (x * (jnp.clip(x + 3.0, 0.0, 6.0) / 6.0)).astype(o_ref.dtype)


def h_swish(x: jax.Array) -> jax.Array:
    """Pallas TPU h_swish: x * relu6(x + 3) / 6, any shape / float dtype."""
    orig_shape = x.shape
    dtype = x.dtype
    n = x.size
    itemsize = jnp.dtype(dtype).itemsize

    # Lane-dense 2-D layout: (rows, 128). Only pad to the next multiple of 128
    # (ragged case); never over-pad to a multiple of the row tile.
    rows = -(-n // _LANE)
    padded_n = rows * _LANE

    # Sublane packing granularity: 8 (32-bit), 16 (16-bit), 32 (8-bit).
    sub = max(8, 32 // itemsize)

    # Dtype-aware row tile: keep block bytes ~constant (~4 MiB) across dtypes.
    target_rows = max(sub, (_TARGET_BLOCK_BYTES // (_LANE * itemsize) // sub) * sub)
    row_tile = min(target_rows, _round_up(rows, sub))
    # Keep >= 2 grid steps on large tensors so v7x's two TensorCores both stream.
    if rows * _LANE * itemsize >= _MIN_SPLIT_BYTES:
        row_tile = min(row_tile, _round_up(-(-rows // 2), sub))

    grid = (pl.cdiv(rows, row_tile),)

    flat = x.reshape(-1)
    if padded_n != n:
        flat = jnp.pad(flat, (0, padded_n - n))  # h_swish(0) == 0: padding inert
    x2d = flat.reshape(rows, _LANE)

    out2d = pl.pallas_call(
        _h_swish_kernel,
        out_shape=jax.ShapeDtypeStruct((rows, _LANE), dtype),
        grid_spec=pltpu.PrefetchScalarGridSpec(
            num_scalar_prefetch=0,
            grid=grid,
            in_specs=[pl.BlockSpec((row_tile, _LANE), lambda i: (i, 0))],
            out_specs=pl.BlockSpec((row_tile, _LANE), lambda i: (i, 0)),
        ),
        compiler_params=pltpu.CompilerParams(
            dimension_semantics=("parallel",),
            vmem_limit_bytes=_VMEM_LIMIT_BYTES,
        ),
        cost_estimate=pl.CostEstimate(
            flops=4 * padded_n,
            transcendentals=0,
            bytes_accessed=2 * padded_n * itemsize,
        ),
    )(x2d)

    if padded_n == n:
        # Fast path: no pad was applied, no trailing slice/copy needed.
        return out2d.reshape(orig_shape)
    return out2d.reshape(-1)[:n].reshape(orig_shape)


def h_swish_ref(x: jax.Array) -> jax.Array:
    """Pure-JAX reference mirroring the PyTorch forward: x * relu6(x+3)/6."""
    return x * (jnp.clip(x + 3.0, 0.0, 6.0) / 6.0)


if __name__ == "__main__":
    key = jax.random.PRNGKey(0)

    # Primary test shape consistent with the module (NCHW activations);
    # element count is a multiple of 128 -> exercises the no-copy fast path.
    B, C, H, W = 2, 4, 16, 16
    x = jax.random.normal(key, (B, C, H, W), dtype=jnp.float32) * 4.0

    out = jax.block_until_ready(h_swish(x))
    ref = h_swish_ref(x)
    assert out.shape == x.shape and out.dtype == x.dtype
    assert jnp.allclose(out, ref, rtol=1e-6, atol=1e-6), "h_swish mismatch vs reference"

    # Ragged shape (element count not a multiple of 128) -> pad/slice path.
    key2 = jax.random.PRNGKey(1)
    x2 = jax.random.normal(key2, (2, 3, 7, 5), dtype=jnp.float32) * 4.0
    out2 = jax.block_until_ready(h_swish(x2))
    assert jnp.allclose(out2, h_swish_ref(x2), rtol=1e-6, atol=1e-6)

    # bf16 path: native-dtype compute, (16,128)-packed tiling.
    x3 = (jax.random.normal(jax.random.PRNGKey(2), (B, C, H, W)) * 4.0).astype(jnp.bfloat16)
    out3 = jax.block_until_ready(h_swish(x3))
    assert out3.dtype == jnp.bfloat16
    assert jnp.allclose(out3.astype(jnp.float32),
                        h_swish_ref(x3).astype(jnp.float32),
                        rtol=2e-2, atol=2e-2)

    print("KERNEL_OK")
</pallas_src>

<mosaic_0001>
module attributes {stable_mosaic.version = 11 : i64} {
  func.func @_h_swish_kernel(%arg0: i32, %arg1: memref<16x128xf32, #tpu.memory_space<vmem>>, %arg2: memref<16x128xf32, #tpu.memory_space<vmem>>) attributes {dimension_semantics = [#tpu.dimension_semantics<parallel>], iteration_bounds = array<i64: 1>, scalar_prefetch = 0 : i64, scratch_operands = 0 : i64, tpu.core_type = #tpu.core_type<tc>, window_params = [{transform_indices = @transform_0, window_bounds = array<i64: 16, 128>}, {transform_indices = @transform_1, window_bounds = array<i64: 16, 128>}]} {
    %c0 = arith.constant 0 : index
    %c0_0 = arith.constant 0 : index
    %0 = vector.load %arg1[%c0, %c0_0] : memref<16x128xf32, #tpu.memory_space<vmem>>, vector<16x128xf32>
    %cst = arith.constant 3.000000e+00 : f32
    %1 = vector.broadcast %cst : f32 to vector<16x128xf32>
    %2 = arith.addf %0, %1 : vector<16x128xf32>
    %cst_1 = arith.constant 0.000000e+00 : f32
    %cst_2 = arith.constant 6.000000e+00 : f32
    %3 = vector.broadcast %cst_1 : f32 to vector<16x128xf32>
    %4 = arith.maximumf %3, %2 : vector<16x128xf32>
    %5 = vector.broadcast %cst_2 : f32 to vector<16x128xf32>
    %6 = arith.minimumf %5, %4 : vector<16x128xf32>
    %cst_3 = arith.constant 6.000000e+00 : f32
    %7 = vector.broadcast %cst_3 : f32 to vector<16x128xf32>
    %8 = arith.divf %6, %7 : vector<16x128xf32>
    %9 = arith.mulf %0, %8 : vector<16x128xf32>
    %c0_4 = arith.constant 0 : index
    %c0_5 = arith.constant 0 : index
    %10 = vector.load %arg2[%c0_4, %c0_5] : memref<16x128xf32, #tpu.memory_space<vmem>>, vector<16x128xf32>
    tpu.vector_store %arg2[%c0_4, %c0_5], %9 {strides = array<i32>} : memref<16x128xf32, #tpu.memory_space<vmem>>, vector<16x128xf32>,
    return
  }
  func.func @transform_0(%arg0: i32) -> (i32, i32) {
    %c0_i32 = arith.constant 0 : i32
    %c0_i32_0 = arith.constant 0 : i32
    return %arg0, %c0_i32 : i32, i32
  }
  func.func @transform_1(%arg0: i32) -> (i32, i32) {
    %c0_i32 = arith.constant 0 : i32
    %c0_i32_0 = arith.constant 0 : i32
    return %arg0, %c0_i32 : i32, i32
  }
}

</mosaic_0001>

<llo_original>
// kernel: tpu_custom_call.1
$region0: #{tpu_custom_call.1}
  #allocation0 [shape = 'u32[]', space=smem, size = 0x4, offset = 0x4, fixed_abs, tag = 'smem constant byte address 0x4 - core index']
  #allocation1 [shape = 'u32[144,128]{1,0:T(1,128)}', space=vmem, size = 0x12000, scoped, tag = 'internal scratch']
  %s0 = inlined_call_operand.hbm [shape: f32[16,128], index: 0, kind: input, shape index: {}]
  %s1 = inlined_call_operand.hbm [shape: f32[16,128], index: 1, kind: output, shape index: {}]
  %s2 = sld [smem:[#allocation0]]
  $region18: #{tpu_custom_call.1} parent=0
    _
  %s4 = ssub.s32 1, %s2
  %s5 = scalar_select 0, %s4, %s2
  $region1: #{tpu_custom_call.1} parent=0
    #allocation2 [shape = 'u8[8192]{0}', space=vmem, size = 0x2000, scoped, tag = 'input window, operand 0, single buffered']
    #allocation3 [shape = 's32[1]{0}', space=sflag, size = 0x4, scoped, tag = 'scoped memory for tpu_custom_call.1']
    #allocation4 [shape = 's32[1]{0}', space=sflag, size = 0x4, scoped, tag = 'scoped memory for tpu_custom_call.1']
    #allocation5 [shape = 'u8[8192]{0}', space=vmem, size = 0x2000, scoped, tag = 'output window, operand 0, single buffered']
    %6 = vsyncpa [#allocation3], 0
    %7 = vsyncpa [#allocation4], 0
    // Predicated region
    $region2: #{tpu_custom_call.1} parent=1 // pred_check
      _
    $region3: #{tpu_custom_call.1} parent=1 // pred_check_branch
      %9 = sbr.rel (0) target = $region5
    $region4: #{tpu_custom_call.1} parent=1 // pred_region
      %s11 = ssub.s32 256, 256
      %12 = vsyncadd [#allocation3], %s11
      %s13 = sshll.u32 [#allocation2], 4
      %s14 = int_to_ptr.vmem [resolvable:$true] %s13
      %19 = dma.hbm_to_vmem [thread:$0]  %s0, 256, %s14, [#allocation3], 128, 128, 8
    $region5: #{tpu_custom_call.1} parent=1 // pred_fallthru
      _
    // Predicated region
    $region6: #{tpu_custom_call.1} parent=1 // pred_check
      _
    $region7: #{tpu_custom_call.1} parent=1 // pred_check_branch
      %21 = sbr.rel (0) target = $region9
    $region8: #{tpu_custom_call.1} parent=1 // pred_region
      %22 = dma.done [#allocation3], 256
    $region9: #{tpu_custom_call.1} parent=1 // pred_fallthru
      _
    %v23 = vld [vmem:[#allocation2] sm:$0xff]
    %v24 = vld [vmem:[#allocation2 + $0x8] sm:$0xff]
    %v25 = vadd.f32 %v23, 3.0
    %v26 = vadd.f32 %v24, 3.0
    %v27 = vmax.f32 %v25, 0.0
    %v28 = vmax.f32 %v26, 0.0
    %v29 = vmin.f32 %v27, 6.0
    %v30 = vmin.f32 %v28, 6.0
    %v31 = vrcp.pop 6.0
    %v32 = vmul.f32 %v29, %v31
    %v33 = vmul.f32 %v30, %v31
    %v34 = vmul.f32 %v23, %v32
    %v35 = vmul.f32 %v24, %v33
    %36 = vst [vmem:[#allocation5] sm:$0xff] %v34
    %37 = vst [vmem:[#allocation5 + $0x8] sm:$0xff] %v35
    // Predicated region
    $region10: #{tpu_custom_call.1} parent=1 // pred_check
      _
    $region11: #{tpu_custom_call.1} parent=1 // pred_check_branch
      %39 = sbr.rel (0) target = $region13
    $region12: #{tpu_custom_call.1} parent=1 // pred_region
      %s41 = ssub.s32 256, 256
      %42 = vsyncadd [#allocation4], %s41
      %s43 = sshll.u32 [#allocation5], 4
      %s44 = int_to_ptr.vmem [resolvable:$true] %s43
      %49 = dma.vmem_to_hbm [thread:$0]  %s44, 256, %s1, [#allocation4], 128, 128, 8
    $region13: #{tpu_custom_call.1} parent=1 // pred_fallthru
      _
    // Predicated region
    $region14: #{tpu_custom_call.1} parent=1 // pred_check
      _
    $region15: #{tpu_custom_call.1} parent=1 // pred_check_branch
      %51 = sbr.rel (0) target = $region17
    $region16: #{tpu_custom_call.1} parent=1 // pred_region
      %52 = dma.done [#allocation4], 256
    $region17: #{tpu_custom_call.1} parent=1 // pred_fallthru
      _
    %53 = vsyncpa [#allocation3], 1
    %54 = vsyncpa [#allocation4], 1

</llo_original>
